<compile_context>
chip_gen: v5e
topology: v5e:2x2
jax: 0.10.0
libtpu: 0.0.40
codegen_flags: <defaults>
</compile_context>

<pallas_src>
import functools

import jax
import jax.numpy as jnp
from jax.experimental import pallas as pl
from jax.experimental.pallas import tpu as pltpu


def _reduce_kernel(x_ref, flipmat_ref, psum_ref, *, mod):
    """Accumulate per-batch, per-lane sums of (x - flip(x))^2 (or |diff|)."""
    t = pl.program_id(1)

    @pl.when(t == 0)
    def _init():
        psum_ref[...] = jnp.zeros_like(psum_ref)

    x = x_ref[0]                                            # (rows_tile, L) f32
    # Flip along W == block-diagonal reversal permutation (MXU matmul).
    flip = jnp.dot(x, flipmat_ref[...], preferred_element_type=jnp.float32)
    diff = x - flip
    if mod in ("MSE", "ED"):
        per_elem = diff * diff
    elif mod == "L1":
        per_elem = jnp.abs(diff)
    else:
        raise ValueError(f"unsupported mod: {mod}")
    partial = jnp.sum(per_elem, axis=0, keepdims=True)      # (1, L) sublane reduce
    psum_ref[...] += partial[None]                          # (1, 1, L) accumulate


def _finalize_kernel(psum_ref, lab_ref, out_ref, *, mod, batch, inv_elems):
    """O(B) finalize reproducing the PyTorch (B, B) broadcast analytically."""
    bsum = jnp.sum(psum_ref[...], axis=1, keepdims=True)    # (B, 1)
    if mod in ("MSE", "L1"):
        bx1 = bsum * inv_elems                              # mean over (c, h, w)
    else:  # "ED"
        bx1 = jnp.sqrt(bsum)
    e = jnp.exp(-bx1)                                       # (B, 1)
    # torch: mean over (B,B) of w_i * (label_i==1 ? e_j : 1 - e_j)
    #      = (1/B^2) * sum_i [ label_i==1 ? S : 1.5 * (B - S) ],  S = sum_j e_j
    s = jnp.sum(e, axis=0, keepdims=True)                   # (1, 1)
    is_one = lab_ref[...] == 1.0                            # (B, 1)
    contrib = jnp.where(is_one, s, 1.5 * (float(batch) - s))  # (B, 1)
    loss = jnp.sum(contrib, axis=0, keepdims=True) * (1.0 / float(batch * batch))
    out_ref[...] = loss


def _pick_lane_width(W, n_per_batch):
    """Pack whole W-segments so the lane dim is a multiple of 128 if possible."""
    if W % 128 == 0:
        return W
    k = 1
    while k * W <= 1024:
        L = k * W
        if L % 128 == 0 and n_per_batch % L == 0:
            return L
        k += 1
    return W  # fallback: lane-sparse but still correct


def _flip_permutation(L, W):
    """(L, L) block-diagonal 0/1 matrix reversing each contiguous W-segment."""
    idx = jnp.arange(L)
    seg = idx // W
    pos = idx % W
    same_seg = seg[:, None] == seg[None, :]
    rev = (pos[:, None] + pos[None, :]) == (W - 1)
    return (same_seg & rev).astype(jnp.float32)


def sym_loss(feature_map, label, mod="MSE"):
    """Pallas implementation of SymLoss.forward(feature_map, label)."""
    if mod not in ("MSE", "L1", "ED"):
        raise ValueError(f"unsupported mod: {mod}")
    B, C, H, W = feature_map.shape
    n_per_batch = C * H * W

    L = _pick_lane_width(W, n_per_batch)
    R = n_per_batch // L                                    # lane-rows per batch
    x3d = feature_map.astype(jnp.float32).reshape(B, R, L)

    # Row-tile size: multiple of 8 sublanes, ~1 MiB per (double-buffered) tile.
    target_tile_bytes = 1 << 20
    max_rows = max(8, (target_tile_bytes // (L * 4)) // 8 * 8)
    rows_tile = min(max_rows, ((R + 7) // 8) * 8)
    R_pad = ((R + rows_tile - 1) // rows_tile) * rows_tile
    if R_pad != R:                                          # zero rows add nothing
        x3d = jnp.pad(x3d, ((0, 0), (0, R_pad - R), (0, 0)))
    T = R_pad // rows_tile

    flipmat = _flip_permutation(L, W)
    lab = label.astype(jnp.float32).reshape(B, 1)

    psums = pl.pallas_call(
        functools.partial(_reduce_kernel, mod=mod),
        out_shape=jax.ShapeDtypeStruct((B, 1, L), jnp.float32),
        grid=(B, T),
        in_specs=[
            pl.BlockSpec((1, rows_tile, L), lambda b, t: (b, t, 0)),
            pl.BlockSpec((L, L), lambda b, t: (0, 0)),      # stays VMEM-resident
        ],
        out_specs=pl.BlockSpec((1, 1, L), lambda b, t: (b, 0, 0)),
        compiler_params=pltpu.CompilerParams(
            dimension_semantics=("parallel", "arbitrary"),
            vmem_limit_bytes=32 * 1024 * 1024,
        ),
    )(x3d, flipmat)

    loss = pl.pallas_call(
        functools.partial(_finalize_kernel, mod=mod, batch=B,
                          inv_elems=1.0 / float(n_per_batch)),
        out_shape=jax.ShapeDtypeStruct((1, 1), jnp.float32),
        in_specs=[
            pl.BlockSpec(memory_space=pltpu.MemorySpace.VMEM),
            pl.BlockSpec(memory_space=pltpu.MemorySpace.VMEM),
        ],
        out_specs=pl.BlockSpec(memory_space=pltpu.MemorySpace.VMEM),
    )(psums.reshape(B, L), lab)
    return loss[0, 0]


def sym_loss_ref(feature_map, label, mod="MSE"):
    """Pure-JAX reference mirroring the PyTorch forward exactly."""
    fm = feature_map.astype(jnp.float32)
    flip = jnp.flip(fm, axis=3)
    if mod == "MSE":
        bx1 = jnp.mean((fm - flip) ** 2, axis=(1, 2, 3))
    elif mod == "L1":
        bx1 = jnp.mean(jnp.abs(fm - flip), axis=(1, 2, 3))
    elif mod == "ED":
        bx1 = jnp.sqrt(jnp.sum((fm - flip) ** 2, axis=(1, 2, 3)))
    lab = label.astype(jnp.float32)                         # (B, 1)
    weights = jnp.where(lab == 1, 1.0, 1.5)                 # (B, 1)
    total = jnp.where(lab == 1, jnp.exp(-bx1), 1.0 - jnp.exp(-bx1))  # (B, B)
    total = total * weights
    return jnp.mean(total)


if __name__ == "__main__":
    key = jax.random.PRNGKey(0)
    k_fm, k_lab = jax.random.split(key)

    B, C, H, W = 2, 4, 16, 16
    feature_map = jax.random.normal(k_fm, (B, C, H, W), dtype=jnp.float32)
    label = jax.random.randint(k_lab, (B, 1), 0, 2).astype(jnp.float32)

    for mod in ("MSE", "L1", "ED"):
        out = jax.block_until_ready(sym_loss(feature_map, label, mod=mod))
        ref = jax.block_until_ready(sym_loss_ref(feature_map, label, mod=mod))
        assert jnp.allclose(out, ref, rtol=1e-5, atol=1e-5), (mod, out, ref)
    print("KERNEL_OK")
</pallas_src>

<mosaic_0001>
module attributes {stable_mosaic.version = 11 : i64} {
  func.func @_reduce_kernel(%arg0: i32, %arg1: i32, %arg2: memref<1x8x128xf32, #tpu.memory_space<vmem>>, %arg3: memref<128x128xf32, #tpu.memory_space<vmem>>, %arg4: memref<1x1x128xf32, #tpu.memory_space<vmem>>) attributes {dimension_semantics = [#tpu.dimension_semantics<parallel>, #tpu.dimension_semantics<arbitrary>], iteration_bounds = array<i64: 2, 1>, scalar_prefetch = 0 : i64, scratch_operands = 0 : i64, tpu.core_type = #tpu.core_type<tc>, window_params = [{transform_indices = @transform_0, window_bounds = array<i64: 1, 8, 128>}, {pipeline_mode = #tpu.pipeline_mode<synchronous>, transform_indices = @transform_1, window_bounds = array<i64: 128, 128>}, {transform_indices = @transform_2, window_bounds = array<i64: 1, 1, 128>}]} {
    %c0_i32 = arith.constant 0 : i32
    %0 = arith.cmpi eq, %arg1, %c0_i32 : i32
    %1 = arith.extui %0 : i1 to i32
    %c0_i32_0 = arith.constant 0 : i32
    %2 = arith.cmpi ne, %1, %c0_i32_0 : i32
    scf.if %2 {
      %cst_12 = arith.constant 0.000000e+00 : f32
      %15 = vector.broadcast %cst_12 : f32 to vector<1x1x128xf32>
      %c0_13 = arith.constant 0 : index
      %c0_14 = arith.constant 0 : index
      %c0_15 = arith.constant 0 : index
      %16 = vector.load %arg4[%c0_13, %c0_14, %c0_15] : memref<1x1x128xf32, #tpu.memory_space<vmem>>, vector<1x1x128xf32>
      tpu.vector_store %arg4[%c0_13, %c0_14, %c0_15], %15 {strides = array<i32>} : memref<1x1x128xf32, #tpu.memory_space<vmem>>, vector<1x1x128xf32>,
    } else {
    }
    %c0 = arith.constant 0 : index
    %c0_1 = arith.constant 0 : index
    %c0_2 = arith.constant 0 : index
    %3 = vector.load %arg2[%c0, %c0_1, %c0_2] : memref<1x8x128xf32, #tpu.memory_space<vmem>>, vector<1x8x128xf32>
    %4 = vector.shape_cast %3 : vector<1x8x128xf32> to vector<8x128xf32>
    %c0_3 = arith.constant 0 : index
    %c0_4 = arith.constant 0 : index
    %5 = vector.load %arg3[%c0_3, %c0_4] : memref<128x128xf32, #tpu.memory_space<vmem>>, vector<128x128xf32>
    %cst = arith.constant dense<0.000000e+00> : vector<8x128xf32>
    %6 = tpu.matmul %4, %5, %cst {dimension_numbers = #tpu.dot_dimension_numbers<[1], [0], [0], [1], [0, 0, 1, 1], [], []>} : vector<8x128xf32>, vector<128x128xf32>, vector<8x128xf32> -> vector<8x128xf32>
    %7 = arith.subf %4, %6 : vector<8x128xf32>
    %8 = arith.mulf %7, %7 : vector<8x128xf32>
    %cst_5 = arith.constant dense<0.000000e+00> : vector<128xf32>
    %9 = vector.multi_reduction <add>, %8, %cst_5 [0] : vector<8x128xf32> to vector<128xf32>
    %10 = vector.shape_cast %9 : vector<128xf32> to vector<1x128xf32>
    %c0_6 = arith.constant 0 : index
    %c0_7 = arith.constant 0 : index
    %c0_8 = arith.constant 0 : index
    %11 = vector.load %arg4[%c0_6, %c0_7, %c0_8] : memref<1x1x128xf32, #tpu.memory_space<vmem>>, vector<1x1x128xf32>
    %12 = vector.shape_cast %10 : vector<1x128xf32> to vector<1x1x128xf32>
    %13 = arith.addf %11, %12 : vector<1x1x128xf32>
    %c0_9 = arith.constant 0 : index
    %c0_10 = arith.constant 0 : index
    %c0_11 = arith.constant 0 : index
    %14 = vector.load %arg4[%c0_9, %c0_10, %c0_11] : memref<1x1x128xf32, #tpu.memory_space<vmem>>, vector<1x1x128xf32>
    tpu.vector_store %arg4[%c0_9, %c0_10, %c0_11], %13 {strides = array<i32>} : memref<1x1x128xf32, #tpu.memory_space<vmem>>, vector<1x1x128xf32>,
    return
  }
  func.func @transform_0(%arg0: i32, %arg1: i32) -> (i32, i32, i32) {
    %c0_i32 = arith.constant 0 : i32
    %c0_i32_0 = arith.constant 0 : i32
    return %arg0, %arg1, %c0_i32 : i32, i32, i32
  }
  func.func @transform_1(%arg0: i32, %arg1: i32) -> (i32, i32) {
    %c0_i32 = arith.constant 0 : i32
    %c0_i32_0 = arith.constant 0 : i32
    %c0_i32_1 = arith.constant 0 : i32
    return %c0_i32, %c0_i32_0 : i32, i32
  }
  func.func @transform_2(%arg0: i32, %arg1: i32) -> (i32, i32, i32) {
    %c0_i32 = arith.constant 0 : i32
    %c0_i32_0 = arith.constant 0 : i32
    %c0_i32_1 = arith.constant 0 : i32
    return %arg0, %c0_i32, %c0_i32_0 : i32, i32, i32
  }
}

</mosaic_0001>

<llo_original>
// kernel: tpu_custom_call.1
$region0: #{tpu_custom_call.1}
  #allocation0 [shape = 'u32[]', space=smem, size = 0x4, offset = 0x4, fixed_abs, tag = 'smem constant byte address 0x4 - core index']
  #allocation1 [shape = 'u32[72,128]{1,0:T(1,128)}', space=vmem, size = 0x9000, scoped, tag = 'internal scratch']
  %s0 = inlined_call_operand.hbm [shape: f32[2,8,128], index: 0, kind: input, shape index: {}]
  %s1 = inlined_call_operand.hbm [shape: f32[128,128], index: 1, kind: input, shape index: {}]
  %s2 = inlined_call_operand.hbm [shape: f32[2,1,128], index: 2, kind: output, shape index: {}]
  %s3 = sld [smem:[#allocation0]]
  $region53: #{tpu_custom_call.1} parent=0
    _
  %s5 = ssub.s32 1, %s3
  %s6 = scalar_select 0, %s5, %s3
  $region1: #{tpu_custom_call.1} parent=0
    #allocation2 [shape = 'u8[8192]{0}', space=vmem, size = 0x2000, scoped, tag = 'input window, operand 0']
    #allocation3 [shape = 's32[2]{0}', space=sflag, size = 0x8, scoped, tag = 'scoped memory for tpu_custom_call.1']
    #allocation4 [shape = 's32[2]{0}', space=sflag, size = 0x8, scoped, tag = 'scoped memory for tpu_custom_call.1']
    #allocation5 [shape = 'u8[65536]{0}', space=vmem, size = 0x10000, scoped, tag = 'input window, operand 1, single buffered']
    #allocation6 [shape = 's32[1]{0}', space=sflag, size = 0x4, scoped, tag = 'scoped memory for tpu_custom_call.1']
    #allocation7 [shape = 'u8[1024]{0}', space=vmem, size = 0x400, scoped, tag = 'output window, operand 0']
    %7 = vsyncpa [#allocation3], 0
    %s8 = scalar_lea.sflag [#allocation3], 1
    %9 = vsyncpa %s8, 0
    %10 = vsyncpa [#allocation6], 0
    %11 = vsyncpa [#allocation4], 0
    %s12 = scalar_lea.sflag [#allocation4], 1
    %13 = vsyncpa %s12, 0
    loop: start=0, step=1, limit=4
    $region2: #{tpu_custom_call.1} parent=1 // loop_pre_header
      _
    $region3: #{tpu_custom_call.1} parent=1 // loop_header
      %s15 = sphi 0, %s19
      %p16 = scmp.ge.s32.totalorder %s15, 4
      %s22 = sphi 0, %s34
      %s23 = sphi 0, %s30
      %s24 = sphi 0, %s22
      %s25 = sphi 0, %s23
      %s26 = sphi 0, %s24
      %s27 = sphi 0, %s25
      %s39 = sphi 0, %s41
      %s42 = sphi 0, %s39
      %s43 = sphi 0, %s42
      %s59 = sphi 0, %s43
      %s63 = sphi 0, %s63
      %s65 = sphi 0, %s63
      %s66 = sphi 0, %s65
      %s80 = sphi 0, %s66
      %s86 = sphi 0, %s88
      %s89 = sphi 0, %s86
      %s90 = sphi 0, %s89
      %s106 = sphi 0, %s90
    $region4: #{tpu_custom_call.1} parent=1 // loop_header_branch
      %18 = sbr.rel (%p16) target = $region8
    $region5: #{tpu_custom_call.1} parent=1 // loop_body
      %s20 = ssub.s32 %s15, 1
      %s21 = ssub.s32 %s15, 2
      %s28 = sadd.s32 1, %s23
      %p29 = scmp.ge.s32.totalorder %s28, 1
      %s30 = scalar_select %p29, 0, %s28
      %s31 = sadd.s32 1, %s22
      %s32 = scalar_select %p29, %s31, %s22
      %p33 = scmp.ge.s32.totalorder %s32, 2
      %s34 = scalar_select %p33, 0, %s32
      %s35 = ssub.s32 %s22, %s34
      %s36 = ssub.s32 %s23, %s30
      %s37 = sor.u32 %s35, %s36
      %p38 = scmp.eq.s32.totalorder %s37, 0
      %s40 = sadd.s32 %s39, 1
      %s41 = scalar_select %p38, %s39, %s40
      %p44 = pneg %p38
      %p45 = scmp.eq.s32.totalorder %s15, 1
      %p46 = por %p44, %p45
      %p47 = scmp.ne.s32.totalorder %s39, %s42
      %p48 = scmp.eq.s32.totalorder %s15, 0
      %p49 = por %p47, %p48
      %p50 = scmp.ne.s32.totalorder %s39, %s42
      %p51 = scmp.eq.s32.totalorder %s20, 1
      %p52 = por %p50, %p51
      %p53 = scmp.ne.s32.totalorder %s42, %s43
      %p54 = scmp.eq.s32.totalorder %s20, 0
      %p55 = por %p53, %p54
      %p56 = scmp.ne.s32.totalorder %s42, %s43
      %p57 = scmp.eq.s32.totalorder %s21, 1
      %p58 = por %p56, %p57
      %p60 = scmp.ne.s32.totalorder %s43, %s59
      %p61 = scmp.eq.s32.totalorder %s21, 0
      %p62 = por %p60, %p61
      %s64 = sadd.s32 %s63, 1
      %p67 = scmp.eq.s32.totalorder %s15, 1
      %p68 = scmp.ne.s32.totalorder %s63, %s65
      %p69 = scmp.eq.s32.totalorder %s15, 0
      %p70 = por %p68, %p69
      %p71 = scmp.ne.s32.totalorder %s63, %s65
      %p72 = scmp.eq.s32.totalorder %s20, 1
      %p73 = por %p71, %p72
      %p74 = scmp.ne.s32.totalorder %s65, %s66
      %p75 = scmp.eq.s32.totalorder %s20, 0
      %p76 = por %p74, %p75
      %p77 = scmp.ne.s32.totalorder %s65, %s66
      %p78 = scmp.eq.s32.totalorder %s21, 1
      %p79 = por %p77, %p78
      %p81 = scmp.ne.s32.totalorder %s66, %s80
      %p82 = scmp.eq.s32.totalorder %s21, 0
      %p83 = por %p81, %p82
      %s84 = ssub.s32 %s22, %s34
      %p85 = scmp.eq.s32.totalorder %s84, 0
      %s87 = sadd.s32 %s86, 1
      %s88 = scalar_select %p85, %s86, %s87
      %p91 = pneg %p85
      %p92 = scmp.eq.s32.totalorder %s15, 1
      %p93 = por %p91, %p92
      %p94 = scmp.ne.s32.totalorder %s86, %s89
      %p95 = scmp.eq.s32.totalorder %s15, 0
      %p96 = por %p94, %p95
      %p97 = scmp.ne.s32.totalorder %s86, %s89
      %p98 = scmp.eq.s32.totalorder %s20, 1
      %p99 = por %p97, %p98
      %p100 = scmp.ne.s32.totalorder %s89, %s90
      %p101 = scmp.eq.s32.totalorder %s20, 0
      %p102 = por %p100, %p101
      %p103 = scmp.ne.s32.totalorder %s89, %s90
      %p104 = scmp.eq.s32.totalorder %s21, 1
      %p105 = por %p103, %p104
      %p107 = scmp.ne.s32.totalorder %s90, %s106
      %p108 = scmp.eq.s32.totalorder %s21, 0
      %p109 = por %p107, %p108
      %p110 = scmp.le.s32.totalorder 1, %s15
      %p111 = scmp.lt.s32.totalorder %s15, 3
      %p112 = pnand %p110, %p111
      %p113 = pneg %p112
      // Predicated region
      $region9: #{tpu_custom_call.1} parent=5 // pred_check
        _
      $region10: #{tpu_custom_call.1} parent=5 // pred_check_branch
        %115 = sbr.rel (%p112) target = $region12
      $region11: #{tpu_custom_call.1} parent=5 // pred_region
        %s116 = ssub.s32 %s15, 1
        // Predicated region
        $region13: #{tpu_custom_call.1} parent=11 // pred_check
          %p117 = pneg %p76
        $region14: #{tpu_custom_call.1} parent=11 // pred_check_branch
          %119 = sbr.rel (%p117) target = $region16
        $region15: #{tpu_custom_call.1} parent=11 // pred_region
          %121 = vsyncadd [#allocation6], 0
          %s122 = sshll.u32 %s1, 4
          %s123 = int_to_ptr.hbm [resolvable:$true] %s122
          %s124 = sshll.u32 [#allocation5], 4
          %s125 = int_to_ptr.vmem [resolvable:$true] %s124
          %130 = dma.hbm_to_vmem [thread:$0]  %s123, 2048, %s125, [#allocation6], 128, 128, 8
        $region16: #{tpu_custom_call.1} parent=11 // pred_fallthru
          _
      $region12: #{tpu_custom_call.1} parent=5 // pred_fallthru
        _
      %p131 = scmp.lt.s32.totalorder %s15, 2
      // Predicated region
      $region17: #{tpu_custom_call.1} parent=5 // pred_check
        %p132 = pneg %p131
      $region18: #{tpu_custom_call.1} parent=5 // pred_check_branch
        %134 = sbr.rel (%p132) target = $region20
      $region19: #{tpu_custom_call.1} parent=5 // pred_region
        // Predicated region
        $region21: #{tpu_custom_call.1} parent=19 // pred_check
          %p135 = pneg %p49
        $region22: #{tpu_custom_call.1} parent=19 // pred_check_branch
          %137 = sbr.rel (%p135) target = $region24
        $region23: #{tpu_custom_call.1} parent=19 // pred_region
          %s138 = sand.u32 %s39, 1
          %s139 = scalar_lea.sflag [#allocation3], %s138
          %s140 = sand.u32 %s39, 1
          %s141 = smul.addr %s140, 8
          %s142 = scalar_lea.vmem [#allocation2], %s141
          %144 = vsyncadd %s139, 0
          %s145 = sadd.s32 %s23, %s22
          %s146 = smul.addr %s145, 8
          %s147 = scalar_lea.hbm %s0, %s146
          %s149 = sshll.u32 %s147, 4
          %s150 = int_to_ptr.hbm [resolvable:$true] %s149
          %s151 = sshll.u32 %s142, 4
          %s152 = int_to_ptr.vmem [resolvable:$true] %s151
          %154 = dma.hbm_to_vmem [thread:$0]  %s150, 128, %s152, %s139
        $region24: #{tpu_custom_call.1} parent=19 // pred_fallthru
          _
      $region20: #{tpu_custom_call.1} parent=5 // pred_fallthru
        _
      %p155 = scmp.le.s32.totalorder 1, %s15
      %p156 = scmp.lt.s32.totalorder %s15, 3
      %p157 = pnand %p155, %p156
      %p158 = pneg %p157
      // Predicated region
      $region25: #{tpu_custom_call.1} parent=5 // pred_check
        _
      $region26: #{tpu_custom_call.1} parent=5 // pred_check_branch
        %160 = sbr.rel (%p157) target = $region28
      $region27: #{tpu_custom_call.1} parent=5 // pred_region
        %s161 = ssub.s32 %s15, 1
        %s162 = sand.u32 %s42, 1
        %s163 = scalar_lea.sflag [#allocation3], %s162
        %s164 = sand.u32 %s42, 1
        %s165 = smul.addr %s164, 8
        %s166 = scalar_lea.vmem [#allocation2], %s165
        // Predicated region
        $region29: #{tpu_custom_call.1} parent=27 // pred_check
          %p167 = pneg %p55
        $region30: #{tpu_custom_call.1} parent=27 // pred_check_branch
          %169 = sbr.rel (%p167) target = $region32
        $region31: #{tpu_custom_call.1} parent=27 // pred_region
          %171 = dma.done %s163, 128
        $region32: #{tpu_custom_call.1} parent=27 // pred_fallthru
          _
        // Predicated region
        $region33: #{tpu_custom_call.1} parent=27 // pred_check
          %p172 = pneg %p76
        $region34: #{tpu_custom_call.1} parent=27 // pred_check_branch
          %174 = sbr.rel (%p172) target = $region36
        $region35: #{tpu_custom_call.1} parent=27 // pred_region
          %176 = dma.done [#allocation6], 2048
        $region36: #{tpu_custom_call.1} parent=27 // pred_fallthru
          _
        %s177 = sand.u32 %s42, 1
        %s178 = scalar_lea.sflag [#allocation3], %s177
        %s179 = sand.u32 %s42, 1
        %s180 = smul.addr %s179, 8
        %s181 = scalar_lea.vmem [#allocation2], %s180
        %p182 = pneg %p55
        %p183 = pneg %p52
        %p184 = pneg %p76
        %p185 = pneg %p73
        %p186 = pneg %p102
        %p187 = pneg %p99
        %s188 = sand.u32 %s89, 1
        %s189 = scalar_lea.sflag [#allocation4], %s188
        %s190 = sand.u32 %s89, 1
        %s191 = scalar_lea.vmem [#allocation7], %s190
        %p192 = scmp.eq.s32.totalorder %s25, 0
        // Predicated region
        $region37: #{tpu_custom_call.1} parent=27 // pred_check
          %p193 = pneg %p192
        $region38: #{tpu_custom_call.1} parent=27 // pred_check_branch
          %195 = sbr.rel (%p193) target = $region40
        $region39: #{tpu_custom_call.1} parent=27 // pred_region
          %196 = vst [vmem:[%s191] sm:$0x1] 0.0
        $region40: #{tpu_custom_call.1} parent=27 // pred_fallthru
          _
        %v197 = vld [vmem:[%s166] sm:$0xff]
        %v198 = vld [vmem:[#allocation5] sm:$0xff]
        %v199 = vld [vmem:[#allocation5 + $0x8] sm:$0xff]
        %v200 = vld [vmem:[#allocation5 + $0x10] sm:$0xff]
        %v201 = vld [vmem:[#allocation5 + $0x18] sm:$0xff]
        %v202 = vld [vmem:[#allocation5 + $0x20] sm:$0xff]
        %v203 = vld [vmem:[#allocation5 + $0x28] sm:$0xff]
        %v204 = vld [vmem:[#allocation5 + $0x30] sm:$0xff]
        %v205 = vld [vmem:[#allocation5 + $0x38] sm:$0xff]
        %v206 = vld [vmem:[#allocation5 + $0x40] sm:$0xff]
        %v207 = vld [vmem:[#allocation5 + $0x48] sm:$0xff]
        %v208 = vld [vmem:[#allocation5 + $0x50] sm:$0xff]
        %v209 = vld [vmem:[#allocation5 + $0x58] sm:$0xff]
        %v210 = vld [vmem:[#allocation5 + $0x60] sm:$0xff]
        %v211 = vld [vmem:[#allocation5 + $0x68] sm:$0xff]
        %v212 = vld [vmem:[#allocation5 + $0x70] sm:$0xff]
        %v213 = vld [vmem:[#allocation5 + $0x78] sm:$0xff]
        %214 = vmatpush.msra.mxu0 %v213
        %215 = vmatpush.msra.mxu0 %v212
        %216 = vmatpush.msra.mxu0 %v211
        %217 = vmatpush.msra.mxu0 %v210
        %218 = vmatpush.msra.mxu0 %v209
        %219 = vmatpush.msra.mxu0 %v208
        %220 = vmatpush.msra.mxu0 %v207
        %221 = vmatpush.msra.mxu0 %v206
        %222 = vmatpush.msra.mxu0 %v205
        %223 = vmatpush.msra.mxu0 %v204
        %224 = vmatpush.msra.mxu0 %v203
        %225 = vmatpush.msra.mxu0 %v202
        %226 = vmatpush.msra.mxu0 %v201
        %227 = vmatpush.msra.mxu0 %v200
        %228 = vmatpush.msra.mxu0 %v199
        %229 = vmatpush.msra.mxu0 %v198
        %230 = vmatmul.f32.gmra.mxu0 %v197
        %v231 = vpop.f32.mrf.mxu0
        %v232 = vadd.f32 0.0, %v231
        %233 = vdwg.mxu0
        %v234 = vsub.f32 %v197, %v232
        %v235 = vmul.f32 %v234, %v234
        %v236 = vrot.slane %v235, 4
        %v237 = vadd.f32 %v235, %v236
        %v238 = vrot.slane %v237, 2
        %v239 = vadd.f32 %v237, %v238
        %v240 = vrot.slane %v239, 1
        %v241 = vadd.f32 %v239, %v240
        %v242 = vld [vmem:[%s191] sm:$0x1]
        %v243 = vadd.f32 %v242, %v241
        %244 = vst [vmem:[%s191] sm:$0x1] %v243
        %s245 = sand.u32 %s89, 1
        %s246 = scalar_lea.sflag [#allocation4], %s245
        %s247 = sand.u32 %s89, 1
        %s248 = scalar_lea.vmem [#allocation7], %s247
        // Predicated region
        $region41: #{tpu_custom_call.1} parent=27 // pred_check
          %p249 = pneg %p99
        $region42: #{tpu_custom_call.1} parent=27 // pred_check_branch
          %251 = sbr.rel (%p249) target = $region44
        $region43: #{tpu_custom_call.1} parent=27 // pred_region
          %253 = vsyncadd %s246, 0
          %s254 = scalar_lea.hbm %s2, %s24
          %s256 = sshll.u32 %s248, 4
          %s257 = int_to_ptr.vmem [resolvable:$true] %s256
          %s258 = sshll.u32 %s254, 4
          %s259 = int_to_ptr.hbm [resolvable:$true] %s258
          %261 = dma.vmem_to_hbm [thread:$0]  %s257, 16, %s259, %s246
        $region44: #{tpu_custom_call.1} parent=27 // pred_fallthru
          _
      $region28: #{tpu_custom_call.1} parent=5 // pred_fallthru
        _
      %p262 = scmp.le.s32.totalorder 2, %s15
      // Predicated region
      $region45: #{tpu_custom_call.1} parent=5 // pred_check
        %p263 = pneg %p262
      $region46: #{tpu_custom_call.1} parent=5 // pred_check_branch
        %265 = sbr.rel (%p263) target = $region48
      $region47: #{tpu_custom_call.1} parent=5 // pred_region
        %s266 = ssub.s32 %s15, 2
        // Predicated region
        $region49: #{tpu_custom_call.1} parent=47 // pred_check
          %p267 = pneg %p105
        $region50: #{tpu_custom_call.1} parent=47 // pred_check_branch
          %269 = sbr.rel (%p267) target = $region52
        $region51: #{tpu_custom_call.1} parent=47 // pred_region
          %s270 = sand.u32 %s90, 1
          %s271 = scalar_lea.sflag [#allocation4], %s270
          %s272 = sand.u32 %s90, 1
          %s273 = scalar_lea.vmem [#allocation7], %s272
          %275 = dma.done %s271, 16
        $region52: #{tpu_custom_call.1} parent=47 // pred_fallthru
          _
      $region48: #{tpu_custom_call.1} parent=5 // pred_fallthru
        _
    $region6: #{tpu_custom_call.1} parent=1 // loop_footer
      %s19 = sadd.s32 1, %s15
    $region7: #{tpu_custom_call.1} parent=1 // loop_footer_branch
      %14 = sbr.rel target = $region3
    $region8: #{tpu_custom_call.1} parent=1 // loop_exit
      _
    %276 = vsyncpa [#allocation3], 1
    %s277 = scalar_lea.sflag [#allocation3], 1
    %278 = vsyncpa %s277, 1
    %279 = vsyncpa [#allocation6], 1
    %280 = vsyncpa [#allocation4], 1
    %s281 = scalar_lea.sflag [#allocation4], 1
    %282 = vsyncpa %s281, 1

</llo_original>
